<compile_context>
chip_gen: v6e
topology: v6e:2x2x1
jax: 0.10.0
libtpu: 0.0.40
codegen_flags: <defaults>
</compile_context>

<pallas_src>
import functools
import math

import jax
import jax.numpy as jnp
from jax.experimental import pallas as pl
from jax.experimental.pallas import tpu as pltpu


def _physics_kernel(mol_ref, feat_ref, out_ref, *, time_step: float):
    # feat: (10, rb), mol: (4, rb), out: (10, rb).  rows live on the lane axis.
    f = feat_ref[...]
    m = mol_ref[...]

    eps = jnp.asarray(1e-6, dtype=f.dtype)
    dt = jnp.asarray(time_step, dtype=f.dtype)

    # per-step deltas: rows of d are [dLA, dK, dVA, dVB]
    d = m * dt
    dLA = d[0:1, :]
    dK = d[1:2, :]
    dVA = d[2:3, :]
    dVB = d[3:4, :]

    # current volumes
    VF = f[7:8, :]
    VA = f[8:9, :]
    VB = f[9:10, :]

    # volume update
    nVF = VF - dVA - dVB
    nVA = VA + dVA
    nVB = VB + dVB

    # slab-wise mole / concentration update for channels [CFLA, CFK, CALA, CBK]
    vol4 = jnp.concatenate([VF, VF, VA, VB], axis=0)              # (4, rb)
    dN4 = jnp.concatenate([-dLA, -dK, dLA, dK], axis=0)           # (4, rb)
    denom4 = jnp.concatenate([nVF, nVF, nVA, nVB], axis=0) + eps  # (4, rb)
    nC4 = (f[3:7, :] * vol4 + dN4) / denom4                       # exact divide

    # direct sub-slab stores (all lane-dense, no 10-way concatenate)
    out_ref[0:3, :] = f[0:3, :]                                   # T, V, E pass through
    out_ref[3:7, :] = nC4
    out_ref[7:10, :] = jnp.concatenate([nVF, nVA, nVB], axis=0)


def physics_layer(mol_changes, features, time_step=0.1, *, row_block=8192):
    """JAX/Pallas equivalent of PhysicsLayer.forward.

    mol_changes: (..., 4), features: (..., 10) -> (..., 10)
    """
    assert mol_changes.shape[-1] == 4
    assert features.shape[-1] == 10
    assert mol_changes.shape[:-1] == features.shape[:-1]

    lead_shape = features.shape[:-1]
    rows = math.prod(lead_shape) if lead_shape else 1

    # channels-first view: rows on the (fast) lane axis
    mol_t = jnp.transpose(mol_changes.reshape(rows, 4))     # (4, rows)
    feat_t = jnp.transpose(features.reshape(rows, 10))      # (10, rows)

    if rows <= row_block:
        rb = rows          # single block covering the full array (always legal)
    else:
        rb = row_block     # multiple of 128; ragged tail handled by Pallas
        assert rb % 128 == 0

    grid = (pl.cdiv(rows, rb),)

    out_t = pl.pallas_call(
        functools.partial(_physics_kernel, time_step=float(time_step)),
        out_shape=jax.ShapeDtypeStruct((10, rows), features.dtype),
        grid_spec=pltpu.PrefetchScalarGridSpec(
            num_scalar_prefetch=0,
            grid=grid,
            in_specs=[
                pl.BlockSpec((4, rb), lambda i: (0, i)),
                pl.BlockSpec((10, rb), lambda i: (0, i)),
            ],
            out_specs=pl.BlockSpec((10, rb), lambda i: (0, i)),
        ),
        compiler_params=pltpu.CompilerParams(
            dimension_semantics=("parallel",),
        ),
    )(mol_t, feat_t)

    return jnp.transpose(out_t).reshape(*lead_shape, 10)


def _reference(mol_changes, features, time_step=0.1):
    """Pure-JAX reference mirroring the PyTorch forward exactly."""
    T = features[..., 0:1]
    V = features[..., 1:2]
    E = features[..., 2:3]
    CFLA = features[..., 3:4]
    CFK = features[..., 4:5]
    CALA = features[..., 5:6]
    CBK = features[..., 6:7]
    VF = features[..., 7:8]
    VA = features[..., 8:9]
    VB = features[..., 9:10]
    NFLA = CFLA * VF
    NFK = CFK * VF
    NALA = CALA * VA
    NBK = CBK * VB
    JLA = mol_changes[..., 0:1]
    JK = mol_changes[..., 1:2]
    JVA = mol_changes[..., 2:3]
    JVB = mol_changes[..., 3:4]
    dLA = JLA * time_step
    dK = JK * time_step
    dVA = JVA * time_step
    dVB = JVB * time_step
    nVF = VF - dVA - dVB
    nVA = VA + dVA
    nVB = VB + dVB
    nNFLA = NFLA - dLA
    nNFK = NFK - dK
    nNALA = NALA + dLA
    nNBK = NBK + dK
    eps = 1e-06
    nCFLA = nNFLA / (nVF + eps)
    nCFK = nNFK / (nVF + eps)
    nCALA = nNALA / (nVA + eps)
    nCBK = nNBK / (nVB + eps)
    return jnp.concatenate(
        [T, V, E, nCFLA, nCFK, nCALA, nCBK, nVF, nVA, nVB], axis=-1
    )


if __name__ == "__main__":
    key = jax.random.PRNGKey(0)
    k1, k2, k3, k4 = jax.random.split(key, 4)

    # small shapes consistent with the LSTM usage: (batch, seq, channels)
    batch, seq = 2, 8
    features = jax.random.uniform(
        k1, (batch, seq, 10), dtype=jnp.float32, minval=0.5, maxval=2.0
    )
    mol_changes = jax.random.normal(k2, (batch, seq, 4), dtype=jnp.float32) * 0.1

    out = physics_layer(mol_changes, features, time_step=0.1)
    out = jax.block_until_ready(out)
    ref = _reference(mol_changes, features, time_step=0.1)
    assert out.shape == (batch, seq, 10)
    assert jnp.allclose(out, ref, atol=1e-5, rtol=1e-5), "mismatch vs reference (small)"

    # exercise the multi-block path with a ragged last block (385 rows, rb=128)
    b2, s2 = 5, 77
    feat2 = jax.random.uniform(
        k3, (b2, s2, 10), dtype=jnp.float32, minval=0.5, maxval=2.0
    )
    mol2 = jax.random.normal(k4, (b2, s2, 4), dtype=jnp.float32) * 0.1
    out2 = jax.block_until_ready(
        physics_layer(mol2, feat2, time_step=0.1, row_block=128)
    )
    ref2 = _reference(mol2, feat2, time_step=0.1)
    assert out2.shape == (b2, s2, 10)
    assert jnp.allclose(out2, ref2, atol=1e-5, rtol=1e-5), "mismatch vs reference (ragged)"

    print("KERNEL_OK")
</pallas_src>

<mosaic_0001>
module attributes {stable_mosaic.version = 11 : i64} {
  func.func @_physics_kernel(%arg0: i32, %arg1: memref<4x16xf32, #tpu.memory_space<vmem>>, %arg2: memref<10x16xf32, #tpu.memory_space<vmem>>, %arg3: memref<10x16xf32, #tpu.memory_space<vmem>>) attributes {dimension_semantics = [#tpu.dimension_semantics<parallel>], iteration_bounds = array<i64: 1>, scalar_prefetch = 0 : i64, scratch_operands = 0 : i64, tpu.core_type = #tpu.core_type<tc>, window_params = [{transform_indices = @transform_0, window_bounds = array<i64: 4, 16>}, {transform_indices = @transform_1, window_bounds = array<i64: 10, 16>}, {transform_indices = @transform_2, window_bounds = array<i64: 10, 16>}]} {
    %c0 = arith.constant 0 : index
    %c0_0 = arith.constant 0 : index
    %0 = vector.load %arg2[%c0, %c0_0] : memref<10x16xf32, #tpu.memory_space<vmem>>, vector<10x16xf32>
    %c0_1 = arith.constant 0 : index
    %c0_2 = arith.constant 0 : index
    %1 = vector.load %arg1[%c0_1, %c0_2] : memref<4x16xf32, #tpu.memory_space<vmem>>, vector<4x16xf32>
    %cst = arith.constant 1.000000e-01 : f32
    %2 = vector.broadcast %cst : f32 to vector<4x16xf32>
    %3 = arith.mulf %1, %2 : vector<4x16xf32>
    %4 = vector.extract_strided_slice %3 {offsets = [0, 0], sizes = [1, 16], strides = [1, 1]} : vector<4x16xf32> to vector<1x16xf32>
    %5 = vector.extract_strided_slice %3 {offsets = [1, 0], sizes = [1, 16], strides = [1, 1]} : vector<4x16xf32> to vector<1x16xf32>
    %6 = vector.extract_strided_slice %3 {offsets = [2, 0], sizes = [1, 16], strides = [1, 1]} : vector<4x16xf32> to vector<1x16xf32>
    %7 = vector.extract_strided_slice %3 {offsets = [3, 0], sizes = [1, 16], strides = [1, 1]} : vector<4x16xf32> to vector<1x16xf32>
    %8 = vector.extract_strided_slice %0 {offsets = [7, 0], sizes = [1, 16], strides = [1, 1]} : vector<10x16xf32> to vector<1x16xf32>
    %9 = vector.extract_strided_slice %0 {offsets = [8, 0], sizes = [1, 16], strides = [1, 1]} : vector<10x16xf32> to vector<1x16xf32>
    %10 = vector.extract_strided_slice %0 {offsets = [9, 0], sizes = [1, 16], strides = [1, 1]} : vector<10x16xf32> to vector<1x16xf32>
    %11 = arith.subf %8, %6 : vector<1x16xf32>
    %12 = arith.subf %11, %7 : vector<1x16xf32>
    %13 = arith.addf %9, %6 : vector<1x16xf32>
    %14 = arith.addf %10, %7 : vector<1x16xf32>
    %15 = tpu.concatenate %8, %8, %9, %10 in 0 : vector<1x16xf32>, vector<1x16xf32>, vector<1x16xf32>, vector<1x16xf32> -> vector<4x16xf32>
    %cst_3 = arith.constant 0.000000e+00 : f32
    %16 = vector.broadcast %cst_3 : f32 to vector<1x16xf32>
    %17 = arith.subf %16, %4 : vector<1x16xf32>
    %cst_4 = arith.constant 0.000000e+00 : f32
    %18 = vector.broadcast %cst_4 : f32 to vector<1x16xf32>
    %19 = arith.subf %18, %5 : vector<1x16xf32>
    %20 = tpu.concatenate %17, %19, %4, %5 in 0 : vector<1x16xf32>, vector<1x16xf32>, vector<1x16xf32>, vector<1x16xf32> -> vector<4x16xf32>
    %21 = tpu.concatenate %12, %12, %13, %14 in 0 : vector<1x16xf32>, vector<1x16xf32>, vector<1x16xf32>, vector<1x16xf32> -> vector<4x16xf32>
    %cst_5 = arith.constant 9.99999997E-7 : f32
    %22 = vector.broadcast %cst_5 : f32 to vector<4x16xf32>
    %23 = arith.addf %21, %22 : vector<4x16xf32>
    %24 = vector.extract_strided_slice %0 {offsets = [3, 0], sizes = [4, 16], strides = [1, 1]} : vector<10x16xf32> to vector<4x16xf32>
    %25 = arith.mulf %24, %15 : vector<4x16xf32>
    %26 = arith.addf %25, %20 : vector<4x16xf32>
    %27 = arith.divf %26, %23 : vector<4x16xf32>
    %28 = vector.extract_strided_slice %0 {offsets = [0, 0], sizes = [3, 16], strides = [1, 1]} : vector<10x16xf32> to vector<3x16xf32>
    %c0_6 = arith.constant 0 : index
    %c0_7 = arith.constant 0 : index
    %29 = vector.load %arg3[%c0_6, %c0_7] : memref<10x16xf32, #tpu.memory_space<vmem>>, vector<3x16xf32>
    tpu.vector_store %arg3[%c0_6, %c0_7], %28 {strides = array<i32>} : memref<10x16xf32, #tpu.memory_space<vmem>>, vector<3x16xf32>,
    %c3 = arith.constant 3 : index
    %c0_8 = arith.constant 0 : index
    %30 = vector.load %arg3[%c3, %c0_8] : memref<10x16xf32, #tpu.memory_space<vmem>>, vector<4x16xf32>
    tpu.vector_store %arg3[%c3, %c0_8], %27 {strides = array<i32>} : memref<10x16xf32, #tpu.memory_space<vmem>>, vector<4x16xf32>,
    %31 = tpu.concatenate %12, %13, %14 in 0 : vector<1x16xf32>, vector<1x16xf32>, vector<1x16xf32> -> vector<3x16xf32>
    %c7 = arith.constant 7 : index
    %c0_9 = arith.constant 0 : index
    %32 = vector.load %arg3[%c7, %c0_9] : memref<10x16xf32, #tpu.memory_space<vmem>>, vector<3x16xf32>
    tpu.vector_store %arg3[%c7, %c0_9], %31 {strides = array<i32>} : memref<10x16xf32, #tpu.memory_space<vmem>>, vector<3x16xf32>,
    return
  }
  func.func @transform_0(%arg0: i32) -> (i32, i32) {
    %c0_i32 = arith.constant 0 : i32
    %c0_i32_0 = arith.constant 0 : i32
    return %c0_i32, %arg0 : i32, i32
  }
  func.func @transform_1(%arg0: i32) -> (i32, i32) {
    %c0_i32 = arith.constant 0 : i32
    %c0_i32_0 = arith.constant 0 : i32
    return %c0_i32, %arg0 : i32, i32
  }
  func.func @transform_2(%arg0: i32) -> (i32, i32) {
    %c0_i32 = arith.constant 0 : i32
    %c0_i32_0 = arith.constant 0 : i32
    return %c0_i32, %arg0 : i32, i32
  }
}

</mosaic_0001>

<llo_original>
// kernel: tpu_custom_call.1
$region0: #{tpu_custom_call.1}
  #allocation0 [shape = 'u32[]', space=smem, size = 0x4, offset = 0x4, fixed_abs, tag = 'smem constant byte address 0x4 - core index']
  #allocation1 [shape = 'u32[144,128]{1,0:T(1,128)}', space=vmem, size = 0x12000, scoped, tag = 'internal scratch']
  %s0 = inlined_call_operand.hbm [shape: f32[4,16], index: 0, kind: input, shape index: {}]
  %s1 = inlined_call_operand.hbm [shape: f32[10,16], index: 1, kind: input, shape index: {}]
  %s2 = inlined_call_operand.hbm [shape: f32[10,16], index: 2, kind: output, shape index: {}]
  %s3 = sld [smem:[#allocation0]]
  $region26: #{tpu_custom_call.1} parent=0
    _
  %s5 = ssub.s32 1, %s3
  %s6 = scalar_select 0, %s5, %s3
  $region1: #{tpu_custom_call.1} parent=0
    #allocation2 [shape = 'u8[2048]{0}', space=vmem, size = 0x800, scoped, tag = 'input window, operand 0, single buffered']
    #allocation3 [shape = 's32[1]{0}', space=sflag, size = 0x4, scoped, tag = 'scoped memory for tpu_custom_call.1']
    #allocation4 [shape = 's32[1]{0}', space=sflag, size = 0x4, scoped, tag = 'scoped memory for tpu_custom_call.1']
    #allocation5 [shape = 'u8[8192]{0}', space=vmem, size = 0x2000, scoped, tag = 'input window, operand 1, single buffered']
    #allocation6 [shape = 's32[1]{0}', space=sflag, size = 0x4, scoped, tag = 'scoped memory for tpu_custom_call.1']
    #allocation7 [shape = 'u8[8192]{0}', space=vmem, size = 0x2000, scoped, tag = 'output window, operand 0, single buffered']
    %7 = vsyncpa [#allocation3], 0
    %8 = vsyncpa [#allocation6], 0
    %9 = vsyncpa [#allocation4], 0
    // Predicated region
    $region2: #{tpu_custom_call.1} parent=1 // pred_check
      _
    $region3: #{tpu_custom_call.1} parent=1 // pred_check_branch
      %11 = sbr.rel (0) target = $region5
    $region4: #{tpu_custom_call.1} parent=1 // pred_region
      %s13 = ssub.s32 64, 64
      %14 = vsyncadd [#allocation3], %s13
      %s16 = sshll.u32 [#allocation2], 4
      %s17 = int_to_ptr.vmem [resolvable:$true] %s16
      %19 = dma.hbm_to_vmem [thread:$0]  %s0, 64, %s17, [#allocation3]
    $region5: #{tpu_custom_call.1} parent=1 // pred_fallthru
      _
    // Predicated region
    $region6: #{tpu_custom_call.1} parent=1 // pred_check
      _
    $region7: #{tpu_custom_call.1} parent=1 // pred_check_branch
      %21 = sbr.rel (0) target = $region9
    $region8: #{tpu_custom_call.1} parent=1 // pred_region
      %s23 = ssub.s32 256, 256
      %24 = vsyncadd [#allocation6], %s23
      %s25 = sshll.u32 [#allocation5], 4
      %s26 = int_to_ptr.vmem [resolvable:$true] %s25
      %31 = dma.hbm_to_vmem [thread:$0]  %s1, 256, %s26, [#allocation6], 128, 128, 8
    $region9: #{tpu_custom_call.1} parent=1 // pred_fallthru
      _
    // Predicated region
    $region10: #{tpu_custom_call.1} parent=1 // pred_check
      _
    $region11: #{tpu_custom_call.1} parent=1 // pred_check_branch
      %33 = sbr.rel (0) target = $region13
    $region12: #{tpu_custom_call.1} parent=1 // pred_region
      %34 = dma.done [#allocation3], 64
    $region13: #{tpu_custom_call.1} parent=1 // pred_fallthru
      _
    // Predicated region
    $region14: #{tpu_custom_call.1} parent=1 // pred_check
      _
    $region15: #{tpu_custom_call.1} parent=1 // pred_check_branch
      %36 = sbr.rel (0) target = $region17
    $region16: #{tpu_custom_call.1} parent=1 // pred_region
      %37 = dma.done [#allocation6], 256
    $region17: #{tpu_custom_call.1} parent=1 // pred_fallthru
      _
    %v38 = vld [vmem:[#allocation5] sm:$0xff]
    %v39 = vld [vmem:[#allocation5 + $0x8] sm:$0x3]
    %v40 = vld [vmem:[#allocation2] sm:$0xf]
    %v41 = vmul.f32 %v40, 0.1
    %v43 = vrot.slane %v41, 3
    %v45 = vsub.f32 %v38, %v43
    %v46 = vrot.slane %v41, 4
    %v48 = vsub.f32 %v45, %v46
    %v49 = vrot.slane %v41, 2
    %v51 = vadd.f32 %v39, %v49
    %v53 = vrot.slane %v38, 7
    %v55 = vrot.slane %v38, 6
    %v58 = vrot.slane %v39, 6
    %vm60 = vcmask 1040384
    %v61 = vsel %vm60, %v53, %v55
    %vm62 = vcmask 1041408
    %v63 = vsel %vm62, %v61, %v58
    %vm64 = vcmask 1042432
    %v65 = vsel %vm64, %v63, %v58
    %v66 = vsub.f32 0.0, %v41
    %v67 = vrot.slane %v41, 6
    %v69 = vsel %vm62, %v66, %v67
    %v70 = vsel %vm64, %v69, %v67
    %v72 = vrot.slane %v48, 7
    %v74 = vrot.slane %v48, 6
    %v77 = vrot.slane %v51, 6
    %v79 = vsel %vm60, %v72, %v74
    %v80 = vsel %vm62, %v79, %v77
    %v81 = vsel %vm64, %v80, %v77
    %v82 = vadd.f32 %v81, 1e-06
    %v84 = vrot.slane %v65, 5
    %v86 = vmul.f32 %v38, %v84
    %v88 = vrot.slane %v70, 5
    %v90 = vadd.f32 %v86, %v88
    %v92 = vrot.slane %v82, 5
    %v94 = vrcp.pop %v92
    %v95 = vmul.f32 %v90, %v94
    %vm96 = vcmask 124928
    %97 = vst.msk [vmem:[#allocation7] sm:$0x7] %vm96, %v38
    %vm98 = vcmask 129027
    %99 = vst.msk [vmem:[#allocation7] sm:$0x78] %vm98, %v95
    %v100 = vrot.slane %v51, 7
    %v102 = vsel %vm60, %v72, %v100
    %v103 = vsel %vm62, %v102, %v100
    %104 = vst.msk [vmem:[#allocation7 + $0x7] sm:$0x7] %vm96, %v103
    // Predicated region
    $region18: #{tpu_custom_call.1} parent=1 // pred_check
      _
    $region19: #{tpu_custom_call.1} parent=1 // pred_check_branch
      %106 = sbr.rel (0) target = $region21
    $region20: #{tpu_custom_call.1} parent=1 // pred_region
      %s108 = ssub.s32 256, 256
      %109 = vsyncadd [#allocation4], %s108
      %s110 = sshll.u32 [#allocation7], 4
      %s111 = int_to_ptr.vmem [resolvable:$true] %s110
      %116 = dma.vmem_to_hbm [thread:$0]  %s111, 256, %s2, [#allocation4], 128, 128, 8
    $region21: #{tpu_custom_call.1} parent=1 // pred_fallthru
      _
    // Predicated region
    $region22: #{tpu_custom_call.1} parent=1 // pred_check
      _
    $region23: #{tpu_custom_call.1} parent=1 // pred_check_branch
      %118 = sbr.rel (0) target = $region25
    $region24: #{tpu_custom_call.1} parent=1 // pred_region
      %119 = dma.done [#allocation4], 256
    $region25: #{tpu_custom_call.1} parent=1 // pred_fallthru
      _
    %120 = vsyncpa [#allocation3], 1
    %121 = vsyncpa [#allocation6], 1
    %122 = vsyncpa [#allocation4], 1

</llo_original>
